<compile_context>
chip_gen: v7x
topology: tpu7x:2x2x1
jax: 0.10.0
libtpu: 0.0.40
codegen_flags: <defaults>
</compile_context>

<pallas_src>
import jax
import jax.numpy as jnp
from jax.experimental import pallas as pl
from jax.experimental.pallas import tpu as pltpu


def _linear_clamp_kernel(xt_ref, wb_ref, o_ref):
    # xt_ref: (8, TL) f32  -- x transposed, lane-dense batch tile
    # wb_ref: (8, TL) f32  -- weight pre-broadcast along lanes, VMEM-resident
    # o_ref:  (1, TL) f32  -- lane-dense output tile
    prod = xt_ref[...] * wb_ref[...]                     # VPU elementwise
    acc = jnp.sum(prod, axis=0, keepdims=True)           # XLU sublane reduce
    # clamp_min(v, -1.0) == max(v, -1.0)
    o_ref[...] = jnp.maximum(acc, -1.0).astype(o_ref.dtype)


def linear_clamp(x, w):
    """x: (B, 8) float32, w: (1, 8) float32 (PyTorch nn.Linear weight layout).

    Returns (B, 1) float32 = clamp_min(x @ w.T, -1.0).
    """
    B, IN = x.shape
    assert w.shape == (1, IN)

    LANE = 128
    MAX_TL = 8192  # 8 * 8192 * 4 B = 256 KiB of x per grid step

    if B <= LANE:
        TL = B                                    # full-extent lane block
    else:
        TL = min(MAX_TL, pl.cdiv(B, 2))           # >= 2 steps for megacore
        TL = ((TL + LANE - 1) // LANE) * LANE     # lane-multiple block

    grid = (pl.cdiv(B, TL),)

    xt = x.T                                              # (8, B)
    wb = jnp.broadcast_to(w.reshape(IN, 1), (IN, TL))     # hoisted broadcast

    x_spec_kwargs = {}
    if grid[0] >= 2 and hasattr(pl, "Buffered"):
        # Deeper input buffering keeps high-BW HBM (v7x) fed; cheap in VMEM.
        x_spec_kwargs["pipeline_mode"] = pl.Buffered(3)

    out = pl.pallas_call(
        _linear_clamp_kernel,
        out_shape=jax.ShapeDtypeStruct((1, B), jnp.float32),
        grid=grid,
        in_specs=[
            pl.BlockSpec((IN, TL), lambda i: (0, i), **x_spec_kwargs),
            pl.BlockSpec((IN, TL), lambda i: (0, 0)),     # resident weight
        ],
        out_specs=pl.BlockSpec((1, TL), lambda i: (0, i)),
        compiler_params=pltpu.CompilerParams(
            dimension_semantics=("parallel",),            # megacore on v7x
        ),
        cost_estimate=pl.CostEstimate(
            flops=2 * IN * B,
            transcendentals=0,
            bytes_accessed=(IN + 1) * 4 * B + IN * TL * 4,
        ),
    )(xt, wb)

    return out.reshape(B, 1)                              # free reshape of (1, B)


if __name__ == "__main__":
    key = jax.random.PRNGKey(0)
    k_x, k_w, k_x2 = jax.random.split(key, 3)

    IN, OUT = 8, 1

    # Weight in PyTorch nn.Linear layout (out=1, in=8), default-init style:
    # uniform(-1/sqrt(in_features), 1/sqrt(in_features)).
    bound = 1.0 / (IN ** 0.5)
    w = jax.random.uniform(k_w, (OUT, IN), dtype=jnp.float32,
                           minval=-bound, maxval=bound)

    # Small batch consistent with the module's (batch, 8) input.
    x_small = jax.random.normal(k_x, (2, IN), dtype=jnp.float32)
    y_small = linear_clamp(x_small, w)
    jax.block_until_ready(y_small)
    ref_small = jnp.maximum(x_small @ w.T, -1.0)
    assert y_small.shape == (2, OUT)
    assert jnp.allclose(y_small, ref_small, atol=1e-5, rtol=1e-5), (y_small, ref_small)

    # Exercises the multi-step grid + masked boundary block (300 % 256 != 0).
    x_big = jax.random.normal(k_x2, (300, IN), dtype=jnp.float32)
    y_big = linear_clamp(x_big, w)
    jax.block_until_ready(y_big)
    ref_big = jnp.maximum(x_big @ w.T, -1.0)
    assert y_big.shape == (300, OUT)
    assert jnp.allclose(y_big, ref_big, atol=1e-5, rtol=1e-5)

    print("KERNEL_OK")
</pallas_src>

<mosaic_0001>
module attributes {stable_mosaic.version = 11 : i64} {
  func.func @_linear_clamp_kernel(%arg0: i32, %arg1: memref<8x2xf32, #tpu.memory_space<vmem>>, %arg2: memref<8x2xf32, #tpu.memory_space<vmem>>, %arg3: memref<1x2xf32, #tpu.memory_space<vmem>>) attributes {dimension_semantics = [#tpu.dimension_semantics<parallel>], iteration_bounds = array<i64: 1>, scalar_prefetch = 0 : i64, scratch_operands = 0 : i64, tpu.core_type = #tpu.core_type<tc>, window_params = [{transform_indices = @transform_0, window_bounds = array<i64: 8, 2>}, {pipeline_mode = #tpu.pipeline_mode<synchronous>, transform_indices = @transform_1, window_bounds = array<i64: 8, 2>}, {transform_indices = @transform_2, window_bounds = array<i64: 1, 2>}]} {
    %c0 = arith.constant 0 : index
    %c0_0 = arith.constant 0 : index
    %0 = vector.load %arg1[%c0, %c0_0] : memref<8x2xf32, #tpu.memory_space<vmem>>, vector<8x2xf32>
    %c0_1 = arith.constant 0 : index
    %c0_2 = arith.constant 0 : index
    %1 = vector.load %arg2[%c0_1, %c0_2] : memref<8x2xf32, #tpu.memory_space<vmem>>, vector<8x2xf32>
    %2 = arith.mulf %0, %1 : vector<8x2xf32>
    %cst = arith.constant dense<0.000000e+00> : vector<2xf32>
    %3 = vector.multi_reduction <add>, %2, %cst [0] : vector<8x2xf32> to vector<2xf32>
    %4 = vector.shape_cast %3 : vector<2xf32> to vector<1x2xf32>
    %cst_3 = arith.constant -1.000000e+00 : f32
    %5 = vector.broadcast %cst_3 : f32 to vector<1x2xf32>
    %6 = arith.maximumf %4, %5 : vector<1x2xf32>
    %c0_4 = arith.constant 0 : index
    %c0_5 = arith.constant 0 : index
    %7 = vector.load %arg3[%c0_4, %c0_5] : memref<1x2xf32, #tpu.memory_space<vmem>>, vector<1x2xf32>
    tpu.vector_store %arg3[%c0_4, %c0_5], %6 {strides = array<i32>} : memref<1x2xf32, #tpu.memory_space<vmem>>, vector<1x2xf32>,
    return
  }
  func.func @transform_0(%arg0: i32) -> (i32, i32) {
    %c0_i32 = arith.constant 0 : i32
    %c0_i32_0 = arith.constant 0 : i32
    return %c0_i32, %arg0 : i32, i32
  }
  func.func @transform_1(%arg0: i32) -> (i32, i32) {
    %c0_i32 = arith.constant 0 : i32
    %c0_i32_0 = arith.constant 0 : i32
    %c0_i32_1 = arith.constant 0 : i32
    return %c0_i32, %c0_i32_0 : i32, i32
  }
  func.func @transform_2(%arg0: i32) -> (i32, i32) {
    %c0_i32 = arith.constant 0 : i32
    %c0_i32_0 = arith.constant 0 : i32
    return %c0_i32, %arg0 : i32, i32
  }
}

</mosaic_0001>

<llo_original>
// kernel: tpu_custom_call.1
$region0: #{tpu_custom_call.1}
  #allocation0 [shape = 'u32[]', space=smem, size = 0x4, offset = 0x4, fixed_abs, tag = 'smem constant byte address 0x4 - core index']
  #allocation1 [shape = 'u32[144,128]{1,0:T(1,128)}', space=vmem, size = 0x12000, scoped, tag = 'internal scratch']
  %s0 = inlined_call_operand.vmem [shape: f32[8,2], index: 0, kind: input, shape index: {}]
  %s1 = inlined_call_operand.vmem [shape: f32[8,2], index: 1, kind: input, shape index: {}]
  %s2 = inlined_call_operand.hbm [shape: f32[1,2], index: 2, kind: output, shape index: {}]
  %s3 = sld [smem:[#allocation0]]
  $region18: #{tpu_custom_call.1} parent=0
    _
  %s5 = ssub.s32 1, %s3
  %s6 = scalar_select 0, %s5, %s3
  $region1: #{tpu_custom_call.1} parent=0
    #allocation2 [shape = 'u8[512]{0}', space=vmem, size = 0x400, scoped, tag = 'output window, operand 0, single buffered']
    #allocation3 [shape = 's32[1]{0}', space=sflag, size = 0x4, scoped, tag = 'scoped memory for tpu_custom_call.1']
    %7 = vsyncpa [#allocation3], 0
    // Predicated region
    $region2: #{tpu_custom_call.1} parent=1 // pred_check
      _
    $region3: #{tpu_custom_call.1} parent=1 // pred_check_branch
      %9 = sbr.rel (0) target = $region5
    $region4: #{tpu_custom_call.1} parent=1 // pred_region
      _
    $region5: #{tpu_custom_call.1} parent=1 // pred_fallthru
      _
    // Predicated region
    $region6: #{tpu_custom_call.1} parent=1 // pred_check
      _
    $region7: #{tpu_custom_call.1} parent=1 // pred_check_branch
      %11 = sbr.rel (0) target = $region9
    $region8: #{tpu_custom_call.1} parent=1 // pred_region
      _
    $region9: #{tpu_custom_call.1} parent=1 // pred_fallthru
      _
    %v12 = vld [vmem:[%s0] sm:$0xff]
    %v13 = vld [vmem:[%s1] sm:$0xff]
    %v14 = vmul.f32 %v12, %v13
    %vm15 = vcmask 15360
    %v16 = vsel %vm15, %v14, 0.0
    %v17 = vrot.slane %v16, 4
    %v18 = vadd.f32 %v16, %v17
    %v19 = vrot.slane %v18, 2
    %v20 = vadd.f32 %v18, %v19
    %v21 = vrot.slane %v20, 1
    %v22 = vadd.f32 %v20, %v21
    %v23 = vmax.f32 %v22, -1.0
    %vm24 = vcmask 8192
    %25 = vst.msk [vmem:[#allocation2] sm:$0x1] %vm24, %v23
    // Predicated region
    $region10: #{tpu_custom_call.1} parent=1 // pred_check
      _
    $region11: #{tpu_custom_call.1} parent=1 // pred_check_branch
      %27 = sbr.rel (0) target = $region13
    $region12: #{tpu_custom_call.1} parent=1 // pred_region
      %s29 = ssub.s32 16, 16
      %30 = vsyncadd [#allocation3], %s29
      %s32 = sshll.u32 [#allocation2], 4
      %s33 = int_to_ptr.vmem [resolvable:$true] %s32
      %35 = dma.vmem_to_hbm [thread:$0]  %s33, 16, %s2, [#allocation3]
    $region13: #{tpu_custom_call.1} parent=1 // pred_fallthru
      _
    // Predicated region
    $region14: #{tpu_custom_call.1} parent=1 // pred_check
      _
    $region15: #{tpu_custom_call.1} parent=1 // pred_check_branch
      %37 = sbr.rel (0) target = $region17
    $region16: #{tpu_custom_call.1} parent=1 // pred_region
      %38 = dma.done [#allocation3], 16
    $region17: #{tpu_custom_call.1} parent=1 // pred_fallthru
      _
    %39 = vsyncpa [#allocation3], 1

</llo_original>
